<compile_context>
chip_gen: v7x
topology: tpu7x:2x2x1
jax: 0.10.0
libtpu: 0.0.40
codegen_flags: <defaults>
</compile_context>

<pallas_src>
import functools

import jax
import jax.numpy as jnp
from jax.experimental import pallas as pl
from jax.experimental.pallas import tpu as pltpu

P = 128          # padded feature width (one full vreg lane dimension)
NUM_LAYERS = 5
HIDDEN = 50      # the PyTorch module's hidden width


def _round_up(x, m):
    return (x + m - 1) // m * m


def _mlp_kernel(x_ref, w_ref, b_ref, o_ref):
    """Fused 5-layer MLP on one (TB, 128) batch tile.

    x_ref: (TB, P)           f32   activation tile (streams over the grid)
    w_ref: (5, P, P)         bf16  zero-padded weight slab (VMEM-resident)
    b_ref: (8, P)            f32   zero-padded bias slab   (rows 0..4 used)
    o_ref: (TB, P)           f32   lane-dense output tile
    """
    h = x_ref[...]
    for layer in range(NUM_LAYERS):
        w = w_ref[layer]                      # (P, P) static slice, bf16
        b = b_ref[pl.ds(layer, 1), :]         # (1, P) f32, broadcast over rows
        h = jnp.dot(h.astype(jnp.bfloat16), w,
                    preferred_element_type=jnp.float32) + b
        if layer < NUM_LAYERS - 1:
            h = jnp.maximum(h, 0.0)           # ReLU; final layer is linear
    o_ref[...] = h


@functools.partial(jax.jit, static_argnames=("num_hidden",))
def representation_model_forward(x, w_slab, b_slab, *, num_hidden):
    """x: (B, num_in) f32 -> (B, num_hidden) f32, matching the PyTorch module."""
    B, num_in = x.shape

    # Batch tiling: small batches -> single tile; large batches -> 512-row tiles.
    TB = min(512, _round_up(max(B, 8), 8))
    B_pad = _round_up(B, TB)

    # Zero-pad batch + feature dims to the lane-dense (B_pad, 128) layout.
    x_pad = jnp.zeros((B_pad, P), jnp.float32).at[:B, :num_in].set(
        x.astype(jnp.float32))

    out = pl.pallas_call(
        _mlp_kernel,
        out_shape=jax.ShapeDtypeStruct((B_pad, P), jnp.float32),
        grid=(B_pad // TB,),
        in_specs=[
            pl.BlockSpec((TB, P), lambda i: (i, 0)),                # x streams
            pl.BlockSpec((NUM_LAYERS, P, P), lambda i: (0, 0, 0)),  # weights resident
            pl.BlockSpec((8, P), lambda i: (0, 0)),                 # biases resident
        ],
        out_specs=pl.BlockSpec((TB, P), lambda i: (i, 0)),
        compiler_params=pltpu.CompilerParams(
            dimension_semantics=("parallel",)),                     # megacore on v7x
    )(x_pad, w_slab, b_slab)

    return out[:B, :num_hidden]


def init_params(key, num_in, num_hidden):
    """PyTorch-style init: U(-1/sqrt(fan_in), 1/sqrt(fan_in)), weights as (in, out)."""
    dims = [(num_in, HIDDEN), (HIDDEN, HIDDEN), (HIDDEN, HIDDEN),
            (HIDDEN, HIDDEN), (HIDDEN, num_hidden)]
    params = {}
    for idx, (fan_in, fan_out) in enumerate(dims, start=1):
        key, kw, kb = jax.random.split(key, 3)
        bound = 1.0 / float(fan_in) ** 0.5
        params[f"w{idx}"] = jax.random.uniform(
            kw, (fan_in, fan_out), jnp.float32, minval=-bound, maxval=bound)
        params[f"b{idx}"] = jax.random.uniform(
            kb, (fan_out,), jnp.float32, minval=-bound, maxval=bound)
    return params


def pack_params(params, num_in, num_hidden, weight_dtype=jnp.bfloat16):
    """Pack 10 small tensors into 2 zero-padded, lane-aligned slabs (done once)."""
    dims = [(num_in, HIDDEN), (HIDDEN, HIDDEN), (HIDDEN, HIDDEN),
            (HIDDEN, HIDDEN), (HIDDEN, num_hidden)]
    w_slab = jnp.zeros((NUM_LAYERS, P, P), weight_dtype)
    b_slab = jnp.zeros((8, P), jnp.float32)   # 8 rows -> clean (8,128) tiling
    for idx, (fi, fo) in enumerate(dims, start=1):
        w_slab = w_slab.at[idx - 1, :fi, :fo].set(
            params[f"w{idx}"].astype(weight_dtype))
        b_slab = b_slab.at[idx - 1, :fo].set(params[f"b{idx}"])
    return w_slab, b_slab


def _reference_f32(x, params):
    """Pure-f32 JAX mirror of the PyTorch nn.Sequential."""
    h = x
    for i in range(1, NUM_LAYERS):
        h = jnp.maximum(h @ params[f"w{i}"] + params[f"b{i}"], 0.0)
    return h @ params[f"w{NUM_LAYERS}"] + params[f"b{NUM_LAYERS}"]


def _reference_kernel_math(x, w_slab, b_slab, num_in, num_hidden):
    """Pure-JAX mirror of the kernel's exact bf16-dot / f32-accumulate math."""
    B = x.shape[0]
    h = jnp.zeros((B, P), jnp.float32).at[:, :num_in].set(x)
    for layer in range(NUM_LAYERS):
        h = jnp.dot(h.astype(jnp.bfloat16), w_slab[layer],
                    preferred_element_type=jnp.float32) + b_slab[layer][None, :]
        if layer < NUM_LAYERS - 1:
            h = jnp.maximum(h, 0.0)
    return h[:, :num_hidden]


if __name__ == "__main__":
    NUM_IN = 16      # num_in
    NUM_HIDDEN = 32  # num_hidden
    BATCH = 8

    key = jax.random.PRNGKey(0)
    key, kx = jax.random.split(key)
    x = jax.random.normal(kx, (BATCH, NUM_IN), jnp.float32)

    params = init_params(key, NUM_IN, NUM_HIDDEN)
    w_slab, b_slab = pack_params(params, NUM_IN, NUM_HIDDEN)

    out = representation_model_forward(x, w_slab, b_slab, num_hidden=NUM_HIDDEN)
    out = jax.block_until_ready(out)
    assert out.shape == (BATCH, NUM_HIDDEN)

    # (a) tight check vs. a pure-JAX mirror of the kernel's bf16/f32 math.
    ref_exact = _reference_kernel_math(x, w_slab, b_slab, NUM_IN, NUM_HIDDEN)
    assert jnp.allclose(out, ref_exact, atol=1e-3, rtol=1e-3), \
        "mismatch vs. kernel-math reference"

    # (b) semantic sanity check vs. the full-f32 PyTorch-style forward
    #     (bf16 weights introduce small, expected quantization error).
    ref_f32 = _reference_f32(x, params)
    assert jnp.allclose(out, ref_f32, atol=1e-1, rtol=1e-1), \
        "mismatch vs. f32 reference"

    # (c) exercise the batch grid + padding path with a larger, ragged batch.
    key, kx2 = jax.random.split(key)
    x_big = jax.random.normal(kx2, (600, NUM_IN), jnp.float32)
    out_big = jax.block_until_ready(
        representation_model_forward(x_big, w_slab, b_slab,
                                     num_hidden=NUM_HIDDEN))
    ref_big = _reference_kernel_math(x_big, w_slab, b_slab, NUM_IN, NUM_HIDDEN)
    assert out_big.shape == (600, NUM_HIDDEN)
    assert jnp.allclose(out_big, ref_big, atol=1e-3, rtol=1e-3), \
        "mismatch vs. reference on tiled batch"

    print("KERNEL_OK")
</pallas_src>

<mosaic_0001>
module attributes {stable_mosaic.version = 11 : i64} {
  func.func @_mlp_kernel(%arg0: i32, %arg1: memref<8x128xf32, #tpu.memory_space<vmem>>, %arg2: memref<5x128x128xbf16, #tpu.memory_space<vmem>>, %arg3: memref<8x128xf32, #tpu.memory_space<vmem>>, %arg4: memref<8x128xf32, #tpu.memory_space<vmem>>) attributes {dimension_semantics = [#tpu.dimension_semantics<parallel>], iteration_bounds = array<i64: 1>, scalar_prefetch = 0 : i64, scratch_operands = 0 : i64, tpu.core_type = #tpu.core_type<tc>, window_params = [{transform_indices = @transform_0, window_bounds = array<i64: 8, 128>}, {pipeline_mode = #tpu.pipeline_mode<synchronous>, transform_indices = @transform_1, window_bounds = array<i64: 5, 128, 128>}, {pipeline_mode = #tpu.pipeline_mode<synchronous>, transform_indices = @transform_2, window_bounds = array<i64: 8, 128>}, {transform_indices = @transform_3, window_bounds = array<i64: 8, 128>}]} {
    %c0 = arith.constant 0 : index
    %c0_0 = arith.constant 0 : index
    %0 = vector.load %arg1[%c0, %c0_0] : memref<8x128xf32, #tpu.memory_space<vmem>>, vector<8x128xf32>
    %c0_1 = arith.constant 0 : index
    %c0_2 = arith.constant 0 : index
    %c0_3 = arith.constant 0 : index
    %1 = vector.load %arg2[%c0_1, %c0_2, %c0_3] : memref<5x128x128xbf16, #tpu.memory_space<vmem>>, vector<1x128x128xbf16>
    %2 = vector.shape_cast %1 : vector<1x128x128xbf16> to vector<128x128xbf16>
    %c0_4 = arith.constant 0 : index
    %c0_5 = arith.constant 0 : index
    %3 = vector.load %arg3[%c0_4, %c0_5] : memref<8x128xf32, #tpu.memory_space<vmem>>, vector<1x128xf32>
    %4 = arith.truncf %0 : vector<8x128xf32> to vector<8x128xbf16>
    %cst = arith.constant dense<0.000000e+00> : vector<8x128xf32>
    %5 = tpu.matmul %4, %2, %cst {dimension_numbers = #tpu.dot_dimension_numbers<[1], [0], [0], [1], [0, 0, 1, 1], [], []>} : vector<8x128xbf16>, vector<128x128xbf16>, vector<8x128xf32> -> vector<8x128xf32>
    %6 = vector.broadcast %3 : vector<1x128xf32> to vector<8x128xf32>
    %7 = arith.addf %5, %6 : vector<8x128xf32>
    %cst_6 = arith.constant 0.000000e+00 : f32
    %8 = vector.broadcast %cst_6 : f32 to vector<8x128xf32>
    %9 = arith.maximumf %7, %8 : vector<8x128xf32>
    %c1 = arith.constant 1 : index
    %c0_7 = arith.constant 0 : index
    %c0_8 = arith.constant 0 : index
    %10 = vector.load %arg2[%c1, %c0_7, %c0_8] : memref<5x128x128xbf16, #tpu.memory_space<vmem>>, vector<1x128x128xbf16>
    %11 = vector.shape_cast %10 : vector<1x128x128xbf16> to vector<128x128xbf16>
    %c1_9 = arith.constant 1 : index
    %c0_10 = arith.constant 0 : index
    %12 = vector.load %arg3[%c1_9, %c0_10] : memref<8x128xf32, #tpu.memory_space<vmem>>, vector<1x128xf32>
    %13 = arith.truncf %9 : vector<8x128xf32> to vector<8x128xbf16>
    %cst_11 = arith.constant dense<0.000000e+00> : vector<8x128xf32>
    %14 = tpu.matmul %13, %11, %cst_11 {dimension_numbers = #tpu.dot_dimension_numbers<[1], [0], [0], [1], [0, 0, 1, 1], [], []>} : vector<8x128xbf16>, vector<128x128xbf16>, vector<8x128xf32> -> vector<8x128xf32>
    %15 = vector.broadcast %12 : vector<1x128xf32> to vector<8x128xf32>
    %16 = arith.addf %14, %15 : vector<8x128xf32>
    %cst_12 = arith.constant 0.000000e+00 : f32
    %17 = vector.broadcast %cst_12 : f32 to vector<8x128xf32>
    %18 = arith.maximumf %16, %17 : vector<8x128xf32>
    %c2 = arith.constant 2 : index
    %c0_13 = arith.constant 0 : index
    %c0_14 = arith.constant 0 : index
    %19 = vector.load %arg2[%c2, %c0_13, %c0_14] : memref<5x128x128xbf16, #tpu.memory_space<vmem>>, vector<1x128x128xbf16>
    %20 = vector.shape_cast %19 : vector<1x128x128xbf16> to vector<128x128xbf16>
    %c2_15 = arith.constant 2 : index
    %c0_16 = arith.constant 0 : index
    %21 = vector.load %arg3[%c2_15, %c0_16] : memref<8x128xf32, #tpu.memory_space<vmem>>, vector<1x128xf32>
    %22 = arith.truncf %18 : vector<8x128xf32> to vector<8x128xbf16>
    %cst_17 = arith.constant dense<0.000000e+00> : vector<8x128xf32>
    %23 = tpu.matmul %22, %20, %cst_17 {dimension_numbers = #tpu.dot_dimension_numbers<[1], [0], [0], [1], [0, 0, 1, 1], [], []>} : vector<8x128xbf16>, vector<128x128xbf16>, vector<8x128xf32> -> vector<8x128xf32>
    %24 = vector.broadcast %21 : vector<1x128xf32> to vector<8x128xf32>
    %25 = arith.addf %23, %24 : vector<8x128xf32>
    %cst_18 = arith.constant 0.000000e+00 : f32
    %26 = vector.broadcast %cst_18 : f32 to vector<8x128xf32>
    %27 = arith.maximumf %25, %26 : vector<8x128xf32>
    %c3 = arith.constant 3 : index
    %c0_19 = arith.constant 0 : index
    %c0_20 = arith.constant 0 : index
    %28 = vector.load %arg2[%c3, %c0_19, %c0_20] : memref<5x128x128xbf16, #tpu.memory_space<vmem>>, vector<1x128x128xbf16>
    %29 = vector.shape_cast %28 : vector<1x128x128xbf16> to vector<128x128xbf16>
    %c3_21 = arith.constant 3 : index
    %c0_22 = arith.constant 0 : index
    %30 = vector.load %arg3[%c3_21, %c0_22] : memref<8x128xf32, #tpu.memory_space<vmem>>, vector<1x128xf32>
    %31 = arith.truncf %27 : vector<8x128xf32> to vector<8x128xbf16>
    %cst_23 = arith.constant dense<0.000000e+00> : vector<8x128xf32>
    %32 = tpu.matmul %31, %29, %cst_23 {dimension_numbers = #tpu.dot_dimension_numbers<[1], [0], [0], [1], [0, 0, 1, 1], [], []>} : vector<8x128xbf16>, vector<128x128xbf16>, vector<8x128xf32> -> vector<8x128xf32>
    %33 = vector.broadcast %30 : vector<1x128xf32> to vector<8x128xf32>
    %34 = arith.addf %32, %33 : vector<8x128xf32>
    %cst_24 = arith.constant 0.000000e+00 : f32
    %35 = vector.broadcast %cst_24 : f32 to vector<8x128xf32>
    %36 = arith.maximumf %34, %35 : vector<8x128xf32>
    %c4 = arith.constant 4 : index
    %c0_25 = arith.constant 0 : index
    %c0_26 = arith.constant 0 : index
    %37 = vector.load %arg2[%c4, %c0_25, %c0_26] : memref<5x128x128xbf16, #tpu.memory_space<vmem>>, vector<1x128x128xbf16>
    %38 = vector.shape_cast %37 : vector<1x128x128xbf16> to vector<128x128xbf16>
    %c4_27 = arith.constant 4 : index
    %c0_28 = arith.constant 0 : index
    %39 = vector.load %arg3[%c4_27, %c0_28] : memref<8x128xf32, #tpu.memory_space<vmem>>, vector<1x128xf32>
    %40 = arith.truncf %36 : vector<8x128xf32> to vector<8x128xbf16>
    %cst_29 = arith.constant dense<0.000000e+00> : vector<8x128xf32>
    %41 = tpu.matmul %40, %38, %cst_29 {dimension_numbers = #tpu.dot_dimension_numbers<[1], [0], [0], [1], [0, 0, 1, 1], [], []>} : vector<8x128xbf16>, vector<128x128xbf16>, vector<8x128xf32> -> vector<8x128xf32>
    %42 = vector.broadcast %39 : vector<1x128xf32> to vector<8x128xf32>
    %43 = arith.addf %41, %42 : vector<8x128xf32>
    %c0_30 = arith.constant 0 : index
    %c0_31 = arith.constant 0 : index
    %44 = vector.load %arg4[%c0_30, %c0_31] : memref<8x128xf32, #tpu.memory_space<vmem>>, vector<8x128xf32>
    tpu.vector_store %arg4[%c0_30, %c0_31], %43 {strides = array<i32>} : memref<8x128xf32, #tpu.memory_space<vmem>>, vector<8x128xf32>,
    return
  }
  func.func @transform_0(%arg0: i32) -> (i32, i32) {
    %c0_i32 = arith.constant 0 : i32
    %c0_i32_0 = arith.constant 0 : i32
    return %arg0, %c0_i32 : i32, i32
  }
  func.func @transform_1(%arg0: i32) -> (i32, i32, i32) {
    %c0_i32 = arith.constant 0 : i32
    %c0_i32_0 = arith.constant 0 : i32
    %c0_i32_1 = arith.constant 0 : i32
    %c0_i32_2 = arith.constant 0 : i32
    return %c0_i32, %c0_i32_0, %c0_i32_1 : i32, i32, i32
  }
  func.func @transform_2(%arg0: i32) -> (i32, i32) {
    %c0_i32 = arith.constant 0 : i32
    %c0_i32_0 = arith.constant 0 : i32
    %c0_i32_1 = arith.constant 0 : i32
    return %c0_i32, %c0_i32_0 : i32, i32
  }
  func.func @transform_3(%arg0: i32) -> (i32, i32) {
    %c0_i32 = arith.constant 0 : i32
    %c0_i32_0 = arith.constant 0 : i32
    return %arg0, %c0_i32 : i32, i32
  }
}

</mosaic_0001>

<llo_original>
// kernel: representation_model_forward.1
$region0: #{representation_model_forward.1}
  #allocation0 [shape = 'u32[]', space=smem, size = 0x4, offset = 0x4, fixed_abs, tag = 'smem constant byte address 0x4 - core index']
  #allocation1 [shape = 'u32[144,128]{1,0:T(1,128)}', space=vmem, size = 0x12000, scoped, tag = 'internal scratch']
  %s0 = inlined_call_operand.vmem [shape: f32[8,128], index: 0, kind: input, shape index: {}]
  %s1 = inlined_call_operand.hbm [shape: bf16[5,128,128], index: 1, kind: input, shape index: {}]
  %s2 = inlined_call_operand.vmem [shape: f32[8,128], index: 2, kind: input, shape index: {}]
  %s3 = inlined_call_operand.hbm [shape: f32[8,128], index: 3, kind: output, shape index: {}]
  %s4 = sld [smem:[#allocation0]]
  $region26: #{representation_model_forward.1} parent=0
    _
  %s6 = ssub.s32 1, %s4
  %s7 = scalar_select 0, %s6, %s4
  $region1: #{representation_model_forward.1} parent=0
    #allocation2 [shape = 'u8[163840]{0}', space=vmem, size = 0x28000, scoped, tag = 'input window, operand 1, single buffered']
    #allocation3 [shape = 's32[1]{0}', space=sflag, size = 0x4, scoped, tag = 'scoped memory for representation_model_forward.1']
    #allocation4 [shape = 's32[1]{0}', space=sflag, size = 0x4, scoped, tag = 'scoped memory for representation_model_forward.1']
    #allocation5 [shape = 'u8[4096]{0}', space=vmem, size = 0x1000, scoped, tag = 'output window, operand 0, single buffered']
    %8 = vsyncpa [#allocation3], 0
    %9 = vsyncpa [#allocation4], 0
    // Predicated region
    $region2: #{representation_model_forward.1} parent=1 // pred_check
      _
    $region3: #{representation_model_forward.1} parent=1 // pred_check_branch
      %11 = sbr.rel (0) target = $region5
    $region4: #{representation_model_forward.1} parent=1 // pred_region
      _
    $region5: #{representation_model_forward.1} parent=1 // pred_fallthru
      _
    // Predicated region
    $region6: #{representation_model_forward.1} parent=1 // pred_check
      _
    $region7: #{representation_model_forward.1} parent=1 // pred_check_branch
      %13 = sbr.rel (0) target = $region9
    $region8: #{representation_model_forward.1} parent=1 // pred_region
      %s15 = ssub.s32 5120, 5120
      %16 = vsyncadd [#allocation3], %s15
      %s17 = sshll.u32 [#allocation2], 4
      %s18 = int_to_ptr.vmem [resolvable:$true] %s17
      %23 = dma.hbm_to_vmem [thread:$0]  %s1, 5120, %s18, [#allocation3], 64, 64, 4
    $region9: #{representation_model_forward.1} parent=1 // pred_fallthru
      _
    // Predicated region
    $region10: #{representation_model_forward.1} parent=1 // pred_check
      _
    $region11: #{representation_model_forward.1} parent=1 // pred_check_branch
      %25 = sbr.rel (0) target = $region13
    $region12: #{representation_model_forward.1} parent=1 // pred_region
      _
    $region13: #{representation_model_forward.1} parent=1 // pred_fallthru
      _
    // Predicated region
    $region14: #{representation_model_forward.1} parent=1 // pred_check
      _
    $region15: #{representation_model_forward.1} parent=1 // pred_check_branch
      %27 = sbr.rel (0) target = $region17
    $region16: #{representation_model_forward.1} parent=1 // pred_region
      %28 = dma.done [#allocation3], 5120
    $region17: #{representation_model_forward.1} parent=1 // pred_fallthru
      _
    %v30 = vld [vmem:[%s0] sm:$0xff]
    %v31 = vld [vmem:[#allocation2] sm:$0xf]
    %v32 = vld [vmem:[#allocation2 + $0x4] sm:$0xf]
    %v33 = vld [vmem:[#allocation2 + $0x8] sm:$0xf]
    %v34 = vld [vmem:[#allocation2 + $0xc] sm:$0xf]
    %v35 = vld [vmem:[#allocation2 + $0x10] sm:$0xf]
    %v36 = vld [vmem:[#allocation2 + $0x14] sm:$0xf]
    %v37 = vld [vmem:[#allocation2 + $0x18] sm:$0xf]
    %v38 = vld [vmem:[#allocation2 + $0x1c] sm:$0xf]
    %v39 = vld [vmem:[#allocation2 + $0x20] sm:$0xf]
    %v40 = vld [vmem:[#allocation2 + $0x24] sm:$0xf]
    %v41 = vld [vmem:[#allocation2 + $0x28] sm:$0xf]
    %v42 = vld [vmem:[#allocation2 + $0x2c] sm:$0xf]
    %v43 = vld [vmem:[#allocation2 + $0x30] sm:$0xf]
    %v44 = vld [vmem:[#allocation2 + $0x34] sm:$0xf]
    %v45 = vld [vmem:[#allocation2 + $0x38] sm:$0xf]
    %v46 = vld [vmem:[#allocation2 + $0x3c] sm:$0xf]
    %v47 = vld [vmem:[%s2] sm:$0x1]
    %v48 = vpack.c.bf16 %v30, %v30
    %v49 = vlaneseq
    %v50 = vshrl.u32 %v49, 7
    %v51 = vsub.s32 0, %v50
    %v52 = vrot.slane %v47, %v51
    %v69 = vunpack.c.l.b16 %v31
    %v70 = vunpack.c.l.b16 %v32
    %v71 = vunpack.c.l.b16 %v33
    %v72 = vunpack.c.l.b16 %v34
    %v73 = vunpack.c.l.b16 %v35
    %v74 = vunpack.c.l.b16 %v36
    %v75 = vunpack.c.l.b16 %v37
    %v76 = vunpack.c.l.b16 %v38
    %v77 = vunpack.c.l.b16 %v39
    %v78 = vunpack.c.l.b16 %v40
    %v79 = vunpack.c.l.b16 %v41
    %v80 = vunpack.c.l.b16 %v42
    %v81 = vunpack.c.l.b16 %v43
    %v82 = vunpack.c.l.b16 %v44
    %v83 = vunpack.c.l.b16 %v45
    %v84 = vunpack.c.l.b16 %v46
    %v85 = vpack.c.b16 %v70, %v69
    %v86 = vpack.c.b16 %v72, %v71
    %v87 = vpack.c.b16 %v74, %v73
    %v88 = vpack.c.b16 %v76, %v75
    %v89 = vpack.c.b16 %v78, %v77
    %v90 = vpack.c.b16 %v80, %v79
    %v91 = vpack.c.b16 %v82, %v81
    %v92 = vpack.c.b16 %v84, %v83
    %101 = vmatprep.subr.bf16.mxu0 0
    %102 = vmatpush1.bf16.msra.mxu0 %v85
    %103 = vmatprep.subr.bf16.mxu0 0
    %104 = vmatpush1.bf16.msra.mxu0 %v86
    %105 = vmatprep.subr.bf16.mxu0 0
    %106 = vmatpush1.bf16.msra.mxu0 %v87
    %107 = vmatprep.subr.bf16.mxu0 0
    %108 = vmatpush1.bf16.msra.mxu0 %v88
    %109 = vmatprep.subr.bf16.mxu0 0
    %110 = vmatpush1.bf16.msra.mxu0 %v89
    %111 = vmatprep.subr.bf16.mxu0 0
    %112 = vmatpush1.bf16.msra.mxu0 %v90
    %113 = vmatprep.subr.bf16.mxu0 0
    %114 = vmatpush1.bf16.msra.mxu0 %v91
    %115 = vmatprep.subr.bf16.mxu0 0
    %116 = vmatpush1.bf16.msra.mxu0 %v92
    %117 = vmatprep.subr.bf16.mxu0 0
    %118 = vmatpush1.bf16.msra.mxu0 0
    %119 = vmatprep.subr.bf16.mxu0 0
    %120 = vmatpush1.bf16.msra.mxu0 0
    %121 = vmatprep.subr.bf16.mxu0 0
    %122 = vmatpush1.bf16.msra.mxu0 0
    %123 = vmatprep.subr.bf16.mxu0 0
    %124 = vmatpush1.bf16.msra.mxu0 0
    %125 = vmatprep.subr.bf16.mxu0 0
    %126 = vmatpush1.bf16.msra.mxu0 0
    %127 = vmatprep.subr.bf16.mxu0 0
    %128 = vmatpush1.bf16.msra.mxu0 0
    %129 = vmatprep.subr.bf16.mxu0 0
    %130 = vmatpush1.bf16.msra.mxu0 0
    %131 = vmatprep.subr.bf16.mxu0 0
    %132 = vmatpush1.bf16.msra.mxu0 0
    %133 = vmatprep.mubr.bf16.mxu0 0
    %134 = vmatmul.mubr.bf16.gmra.mrb[0].mxu0 %v48
    %v135 = vpop.f32.mrb[0].mxu0
    %v136 = vadd.f32 %v52, %v135
    %v137 = vpop.f32.mrb[0].mxu0
    %v138 = vpop.f32.mrb[0].mxu0
    %v139 = vpop.f32.mrb[0].mxu0
    %140 = vdwg.mxu0
    %v141 = vmax.f32 %v136, 0.0
    %s142 = scalar_lea.vmem [#allocation2], 64
    %v143 = vld [vmem:[%s142] sm:$0xf]
    %v144 = vld [vmem:[%s142 + $0x4] sm:$0xf]
    %v145 = vld [vmem:[%s142 + $0x8] sm:$0xf]
    %v146 = vld [vmem:[%s142 + $0xc] sm:$0xf]
    %v147 = vld [vmem:[%s142 + $0x10] sm:$0xf]
    %v148 = vld [vmem:[%s142 + $0x14] sm:$0xf]
    %v149 = vld [vmem:[%s142 + $0x18] sm:$0xf]
    %v150 = vld [vmem:[%s142 + $0x1c] sm:$0xf]
    %v151 = vld [vmem:[%s142 + $0x20] sm:$0xf]
    %v152 = vld [vmem:[%s142 + $0x24] sm:$0xf]
    %v153 = vld [vmem:[%s142 + $0x28] sm:$0xf]
    %v154 = vld [vmem:[%s142 + $0x2c] sm:$0xf]
    %v155 = vld [vmem:[%s142 + $0x30] sm:$0xf]
    %v156 = vld [vmem:[%s142 + $0x34] sm:$0xf]
    %v157 = vld [vmem:[%s142 + $0x38] sm:$0xf]
    %v158 = vld [vmem:[%s142 + $0x3c] sm:$0xf]
    %v159 = vld [vmem:[%s2 + $0x1] sm:$0x1]
    %v160 = vpack.c.bf16 %v141, %v141
    %v161 = vlaneseq
    %v162 = vshrl.u32 %v161, 7
    %v163 = vsub.s32 0, %v162
    %v164 = vrot.slane %v159, %v163
    %v181 = vunpack.c.l.b16 %v143
    %v182 = vunpack.c.l.b16 %v144
    %v183 = vunpack.c.l.b16 %v145
    %v184 = vunpack.c.l.b16 %v146
    %v185 = vunpack.c.l.b16 %v147
    %v186 = vunpack.c.l.b16 %v148
    %v187 = vunpack.c.l.b16 %v149
    %v188 = vunpack.c.l.b16 %v150
    %v189 = vunpack.c.l.b16 %v151
    %v190 = vunpack.c.l.b16 %v152
    %v191 = vunpack.c.l.b16 %v153
    %v192 = vunpack.c.l.b16 %v154
    %v193 = vunpack.c.l.b16 %v155
    %v194 = vunpack.c.l.b16 %v156
    %v195 = vunpack.c.l.b16 %v157
    %v196 = vunpack.c.l.b16 %v158
    %v197 = vpack.c.b16 %v182, %v181
    %v198 = vpack.c.b16 %v184, %v183
    %v199 = vpack.c.b16 %v186, %v185
    %v200 = vpack.c.b16 %v188, %v187
    %v201 = vpack.c.b16 %v190, %v189
    %v202 = vpack.c.b16 %v192, %v191
    %v203 = vpack.c.b16 %v194, %v193
    %v204 = vpack.c.b16 %v196, %v195
    %213 = vmatprep.subr.bf16.mxu0 0
    %214 = vmatpush1.bf16.msra.mxu0 %v197
    %215 = vmatprep.subr.bf16.mxu0 0
    %216 = vmatpush1.bf16.msra.mxu0 %v198
    %217 = vmatprep.subr.bf16.mxu0 0
    %218 = vmatpush1.bf16.msra.mxu0 %v199
    %219 = vmatprep.subr.bf16.mxu0 0
    %220 = vmatpush1.bf16.msra.mxu0 %v200
    %221 = vmatprep.subr.bf16.mxu0 0
    %222 = vmatpush1.bf16.msra.mxu0 %v201
    %223 = vmatprep.subr.bf16.mxu0 0
    %224 = vmatpush1.bf16.msra.mxu0 %v202
    %225 = vmatprep.subr.bf16.mxu0 0
    %226 = vmatpush1.bf16.msra.mxu0 %v203
    %227 = vmatprep.subr.bf16.mxu0 0
    %228 = vmatpush1.bf16.msra.mxu0 %v204
    %229 = vmatprep.subr.bf16.mxu0 0
    %230 = vmatpush1.bf16.msra.mxu0 0
    %231 = vmatprep.subr.bf16.mxu0 0
    %232 = vmatpush1.bf16.msra.mxu0 0
    %233 = vmatprep.subr.bf16.mxu0 0
    %234 = vmatpush1.bf16.msra.mxu0 0
    %235 = vmatprep.subr.bf16.mxu0 0
    %236 = vmatpush1.bf16.msra.mxu0 0
    %237 = vmatprep.subr.bf16.mxu0 0
    %238 = vmatpush1.bf16.msra.mxu0 0
    %239 = vmatprep.subr.bf16.mxu0 0
    %240 = vmatpush1.bf16.msra.mxu0 0
    %241 = vmatprep.subr.bf16.mxu0 0
    %242 = vmatpush1.bf16.msra.mxu0 0
    %243 = vmatprep.subr.bf16.mxu0 0
    %244 = vmatpush1.bf16.msra.mxu0 0
    %245 = vmatprep.mubr.bf16.mxu0 0
    %246 = vmatmul.mubr.bf16.gmra.mrb[0].mxu0 %v160
    %v247 = vpop.f32.mrb[0].mxu0
    %v248 = vadd.f32 %v164, %v247
    %v249 = vpop.f32.mrb[0].mxu0
    %v250 = vpop.f32.mrb[0].mxu0
    %v251 = vpop.f32.mrb[0].mxu0
    %252 = vdwg.mxu0
    %v253 = vmax.f32 %v248, 0.0
    %s254 = scalar_lea.vmem [#allocation2], 128
    %v255 = vld [vmem:[%s254] sm:$0xf]
    %v256 = vld [vmem:[%s254 + $0x4] sm:$0xf]
    %v257 = vld [vmem:[%s254 + $0x8] sm:$0xf]
    %v258 = vld [vmem:[%s254 + $0xc] sm:$0xf]
    %v259 = vld [vmem:[%s254 + $0x10] sm:$0xf]
    %v260 = vld [vmem:[%s254 + $0x14] sm:$0xf]
    %v261 = vld [vmem:[%s254 + $0x18] sm:$0xf]
    %v262 = vld [vmem:[%s254 + $0x1c] sm:$0xf]
    %v263 = vld [vmem:[%s254 + $0x20] sm:$0xf]
    %v264 = vld [vmem:[%s254 + $0x24] sm:$0xf]
    %v265 = vld [vmem:[%s254 + $0x28] sm:$0xf]
    %v266 = vld [vmem:[%s254 + $0x2c] sm:$0xf]
    %v267 = vld [vmem:[%s254 + $0x30] sm:$0xf]
    %v268 = vld [vmem:[%s254 + $0x34] sm:$0xf]
    %v269 = vld [vmem:[%s254 + $0x38] sm:$0xf]
    %v270 = vld [vmem:[%s254 + $0x3c] sm:$0xf]
    %v271 = vld [vmem:[%s2 + $0x2] sm:$0x1]
    %v272 = vpack.c.bf16 %v253, %v253
    %v273 = vlaneseq
    %v274 = vshrl.u32 %v273, 7
    %v275 = vsub.s32 0, %v274
    %v276 = vrot.slane %v271, %v275
    %v293 = vunpack.c.l.b16 %v255
    %v294 = vunpack.c.l.b16 %v256
    %v295 = vunpack.c.l.b16 %v257
    %v296 = vunpack.c.l.b16 %v258
    %v297 = vunpack.c.l.b16 %v259
    %v298 = vunpack.c.l.b16 %v260
    %v299 = vunpack.c.l.b16 %v261
    %v300 = vunpack.c.l.b16 %v262
    %v301 = vunpack.c.l.b16 %v263
    %v302 = vunpack.c.l.b16 %v264
    %v303 = vunpack.c.l.b16 %v265
    %v304 = vunpack.c.l.b16 %v266
    %v305 = vunpack.c.l.b16 %v267
    %v306 = vunpack.c.l.b16 %v268
    %v307 = vunpack.c.l.b16 %v269
    %v308 = vunpack.c.l.b16 %v270
    %v309 = vpack.c.b16 %v294, %v293
    %v310 = vpack.c.b16 %v296, %v295
    %v311 = vpack.c.b16 %v298, %v297
    %v312 = vpack.c.b16 %v300, %v299
    %v313 = vpack.c.b16 %v302, %v301
    %v314 = vpack.c.b16 %v304, %v303
    %v315 = vpack.c.b16 %v306, %v305
    %v316 = vpack.c.b16 %v308, %v307
    %325 = vmatprep.subr.bf16.mxu0 0
    %326 = vmatpush1.bf16.msra.mxu0 %v309
    %327 = vmatprep.subr.bf16.mxu0 0
    %328 = vmatpush1.bf16.msra.mxu0 %v310
    %329 = vmatprep.subr.bf16.mxu0 0
    %330 = vmatpush1.bf16.msra.mxu0 %v311
    %331 = vmatprep.subr.bf16.mxu0 0
    %332 = vmatpush1.bf16.msra.mxu0 %v312
    %333 = vmatprep.subr.bf16.mxu0 0
    %334 = vmatpush1.bf16.msra.mxu0 %v313
    %335 = vmatprep.subr.bf16.mxu0 0
    %336 = vmatpush1.bf16.msra.mxu0 %v314
    %337 = vmatprep.subr.bf16.mxu0 0
    %338 = vmatpush1.bf16.msra.mxu0 %v315
    %339 = vmatprep.subr.bf16.mxu0 0
    %340 = vmatpush1.bf16.msra.mxu0 %v316
    %341 = vmatprep.subr.bf16.mxu0 0
    %342 = vmatpush1.bf16.msra.mxu0 0
    %343 = vmatprep.subr.bf16.mxu0 0
    %344 = vmatpush1.bf16.msra.mxu0 0
    %345 = vmatprep.subr.bf16.mxu0 0
    %346 = vmatpush1.bf16.msra.mxu0 0
    %347 = vmatprep.subr.bf16.mxu0 0
    %348 = vmatpush1.bf16.msra.mxu0 0
    %349 = vmatprep.subr.bf16.mxu0 0
    %350 = vmatpush1.bf16.msra.mxu0 0
    %351 = vmatprep.subr.bf16.mxu0 0
    %352 = vmatpush1.bf16.msra.mxu0 0
    %353 = vmatprep.subr.bf16.mxu0 0
    %354 = vmatpush1.bf16.msra.mxu0 0
    %355 = vmatprep.subr.bf16.mxu0 0
    %356 = vmatpush1.bf16.msra.mxu0 0
    %357 = vmatprep.mubr.bf16.mxu0 0
    %358 = vmatmul.mubr.bf16.gmra.mrb[0].mxu0 %v272
    %v359 = vpop.f32.mrb[0].mxu0
    %v360 = vadd.f32 %v276, %v359
    %v361 = vpop.f32.mrb[0].mxu0
    %v362 = vpop.f32.mrb[0].mxu0
    %v363 = vpop.f32.mrb[0].mxu0
    %364 = vdwg.mxu0
    %v365 = vmax.f32 %v360, 0.0
    %s366 = scalar_lea.vmem [#allocation2], 192
    %v367 = vld [vmem:[%s366] sm:$0xf]
    %v368 = vld [vmem:[%s366 + $0x4] sm:$0xf]
    %v369 = vld [vmem:[%s366 + $0x8] sm:$0xf]
    %v370 = vld [vmem:[%s366 + $0xc] sm:$0xf]
    %v371 = vld [vmem:[%s366 + $0x10] sm:$0xf]
    %v372 = vld [vmem:[%s366 + $0x14] sm:$0xf]
    %v373 = vld [vmem:[%s366 + $0x18] sm:$0xf]
    %v374 = vld [vmem:[%s366 + $0x1c] sm:$0xf]
    %v375 = vld [vmem:[%s366 + $0x20] sm:$0xf]
    %v376 = vld [vmem:[%s366 + $0x24] sm:$0xf]
    %v377 = vld [vmem:[%s366 + $0x28] sm:$0xf]
    %v378 = vld [vmem:[%s366 + $0x2c] sm:$0xf]
    %v379 = vld [vmem:[%s366 + $0x30] sm:$0xf]
    %v380 = vld [vmem:[%s366 + $0x34] sm:$0xf]
    %v381 = vld [vmem:[%s366 + $0x38] sm:$0xf]
    %v382 = vld [vmem:[%s366 + $0x3c] sm:$0xf]
    %v383 = vld [vmem:[%s2 + $0x3] sm:$0x1]
    %v384 = vpack.c.bf16 %v365, %v365
    %v385 = vlaneseq
    %v386 = vshrl.u32 %v385, 7
    %v387 = vsub.s32 0, %v386
    %v388 = vrot.slane %v383, %v387
    %v405 = vunpack.c.l.b16 %v367
    %v406 = vunpack.c.l.b16 %v368
    %v407 = vunpack.c.l.b16 %v369
    %v408 = vunpack.c.l.b16 %v370
    %v409 = vunpack.c.l.b16 %v371
    %v410 = vunpack.c.l.b16 %v372
    %v411 = vunpack.c.l.b16 %v373
    %v412 = vunpack.c.l.b16 %v374
    %v413 = vunpack.c.l.b16 %v375
    %v414 = vunpack.c.l.b16 %v376
    %v415 = vunpack.c.l.b16 %v377
    %v416 = vunpack.c.l.b16 %v378
    %v417 = vunpack.c.l.b16 %v379
    %v418 = vunpack.c.l.b16 %v380
    %v419 = vunpack.c.l.b16 %v381
    %v420 = vunpack.c.l.b16 %v382
    %v421 = vpack.c.b16 %v406, %v405
    %v422 = vpack.c.b16 %v408, %v407
    %v423 = vpack.c.b16 %v410, %v409
    %v424 = vpack.c.b16 %v412, %v411
    %v425 = vpack.c.b16 %v414, %v413
    %v426 = vpack.c.b16 %v416, %v415
    %v427 = vpack.c.b16 %v418, %v417
    %v428 = vpack.c.b16 %v420, %v419
    %437 = vmatprep.subr.bf16.mxu0 0
    %438 = vmatpush1.bf16.msra.mxu0 %v421
    %439 = vmatprep.subr.bf16.mxu0 0
    %440 = vmatpush1.bf16.msra.mxu0 %v422
    %441 = vmatprep.subr.bf16.mxu0 0
    %442 = vmatpush1.bf16.msra.mxu0 %v423
    %443 = vmatprep.subr.bf16.mxu0 0
    %444 = vmatpush1.bf16.msra.mxu0 %v424
    %445 = vmatprep.subr.bf16.mxu0 0
    %446 = vmatpush1.bf16.msra.mxu0 %v425
    %447 = vmatprep.subr.bf16.mxu0 0
    %448 = vmatpush1.bf16.msra.mxu0 %v426
    %449 = vmatprep.subr.bf16.mxu0 0
    %450 = vmatpush1.bf16.msra.mxu0 %v427
    %451 = vmatprep.subr.bf16.mxu0 0
    %452 = vmatpush1.bf16.msra.mxu0 %v428
    %453 = vmatprep.subr.bf16.mxu0 0
    %454 = vmatpush1.bf16.msra.mxu0 0
    %455 = vmatprep.subr.bf16.mxu0 0
    %456 = vmatpush1.bf16.msra.mxu0 0
    %457 = vmatprep.subr.bf16.mxu0 0
    %458 = vmatpush1.bf16.msra.mxu0 0
    %459 = vmatprep.subr.bf16.mxu0 0
    %460 = vmatpush1.bf16.msra.mxu0 0
    %461 = vmatprep.subr.bf16.mxu0 0
    %462 = vmatpush1.bf16.msra.mxu0 0
    %463 = vmatprep.subr.bf16.mxu0 0
    %464 = vmatpush1.bf16.msra.mxu0 0
    %465 = vmatprep.subr.bf16.mxu0 0
    %466 = vmatpush1.bf16.msra.mxu0 0
    %467 = vmatprep.subr.bf16.mxu0 0
    %468 = vmatpush1.bf16.msra.mxu0 0
    %469 = vmatprep.mubr.bf16.mxu0 0
    %470 = vmatmul.mubr.bf16.gmra.mrb[0].mxu0 %v384
    %v471 = vpop.f32.mrb[0].mxu0
    %v472 = vadd.f32 %v388, %v471
    %v473 = vpop.f32.mrb[0].mxu0
    %v474 = vpop.f32.mrb[0].mxu0
    %v475 = vpop.f32.mrb[0].mxu0
    %476 = vdwg.mxu0
    %v477 = vmax.f32 %v472, 0.0
    %s478 = scalar_lea.vmem [#allocation2], 256
    %v479 = vld [vmem:[%s478] sm:$0xf]
    %v480 = vld [vmem:[%s478 + $0x4] sm:$0xf]
    %v481 = vld [vmem:[%s478 + $0x8] sm:$0xf]
    %v482 = vld [vmem:[%s478 + $0xc] sm:$0xf]
    %v483 = vld [vmem:[%s478 + $0x10] sm:$0xf]
    %v484 = vld [vmem:[%s478 + $0x14] sm:$0xf]
    %v485 = vld [vmem:[%s478 + $0x18] sm:$0xf]
    %v486 = vld [vmem:[%s478 + $0x1c] sm:$0xf]
    %v487 = vld [vmem:[%s478 + $0x20] sm:$0xf]
    %v488 = vld [vmem:[%s478 + $0x24] sm:$0xf]
    %v489 = vld [vmem:[%s478 + $0x28] sm:$0xf]
    %v490 = vld [vmem:[%s478 + $0x2c] sm:$0xf]
    %v491 = vld [vmem:[%s478 + $0x30] sm:$0xf]
    %v492 = vld [vmem:[%s478 + $0x34] sm:$0xf]
    %v493 = vld [vmem:[%s478 + $0x38] sm:$0xf]
    %v494 = vld [vmem:[%s478 + $0x3c] sm:$0xf]
    %v495 = vld [vmem:[%s2 + $0x4] sm:$0x1]
    %v496 = vpack.c.bf16 %v477, %v477
    %v497 = vlaneseq
    %v498 = vshrl.u32 %v497, 7
    %v499 = vsub.s32 0, %v498
    %v500 = vrot.slane %v495, %v499
    %v517 = vunpack.c.l.b16 %v479
    %v518 = vunpack.c.l.b16 %v480
    %v519 = vunpack.c.l.b16 %v481
    %v520 = vunpack.c.l.b16 %v482
    %v521 = vunpack.c.l.b16 %v483
    %v522 = vunpack.c.l.b16 %v484
    %v523 = vunpack.c.l.b16 %v485
    %v524 = vunpack.c.l.b16 %v486
    %v525 = vunpack.c.l.b16 %v487
    %v526 = vunpack.c.l.b16 %v488
    %v527 = vunpack.c.l.b16 %v489
    %v528 = vunpack.c.l.b16 %v490
    %v529 = vunpack.c.l.b16 %v491
    %v530 = vunpack.c.l.b16 %v492
    %v531 = vunpack.c.l.b16 %v493
    %v532 = vunpack.c.l.b16 %v494
    %v533 = vpack.c.b16 %v518, %v517
    %v534 = vpack.c.b16 %v520, %v519
    %v535 = vpack.c.b16 %v522, %v521
    %v536 = vpack.c.b16 %v524, %v523
    %v537 = vpack.c.b16 %v526, %v525
    %v538 = vpack.c.b16 %v528, %v527
    %v539 = vpack.c.b16 %v530, %v529
    %v540 = vpack.c.b16 %v532, %v531
    %549 = vmatprep.subr.bf16.mxu0 0
    %550 = vmatpush1.bf16.msra.mxu0 %v533
    %551 = vmatprep.subr.bf16.mxu0 0
    %552 = vmatpush1.bf16.msra.mxu0 %v534
    %553 = vmatprep.subr.bf16.mxu0 0
    %554 = vmatpush1.bf16.msra.mxu0 %v535
    %555 = vmatprep.subr.bf16.mxu0 0
    %556 = vmatpush1.bf16.msra.mxu0 %v536
    %557 = vmatprep.subr.bf16.mxu0 0
    %558 = vmatpush1.bf16.msra.mxu0 %v537
    %559 = vmatprep.subr.bf16.mxu0 0
    %560 = vmatpush1.bf16.msra.mxu0 %v538
    %561 = vmatprep.subr.bf16.mxu0 0
    %562 = vmatpush1.bf16.msra.mxu0 %v539
    %563 = vmatprep.subr.bf16.mxu0 0
    %564 = vmatpush1.bf16.msra.mxu0 %v540
    %565 = vmatprep.subr.bf16.mxu0 0
    %566 = vmatpush1.bf16.msra.mxu0 0
    %567 = vmatprep.subr.bf16.mxu0 0
    %568 = vmatpush1.bf16.msra.mxu0 0
    %569 = vmatprep.subr.bf16.mxu0 0
    %570 = vmatpush1.bf16.msra.mxu0 0
    %571 = vmatprep.subr.bf16.mxu0 0
    %572 = vmatpush1.bf16.msra.mxu0 0
    %573 = vmatprep.subr.bf16.mxu0 0
    %574 = vmatpush1.bf16.msra.mxu0 0
    %575 = vmatprep.subr.bf16.mxu0 0
    %576 = vmatpush1.bf16.msra.mxu0 0
    %577 = vmatprep.subr.bf16.mxu0 0
    %578 = vmatpush1.bf16.msra.mxu0 0
    %579 = vmatprep.subr.bf16.mxu0 0
    %580 = vmatpush1.bf16.msra.mxu0 0
    %581 = vmatprep.mubr.bf16.mxu0 0
    %582 = vmatmul.mubr.bf16.gmra.mrb[0].mxu0 %v496
    %v583 = vpop.f32.mrb[0].mxu0
    %v584 = vadd.f32 %v500, %v583
    %v585 = vpop.f32.mrb[0].mxu0
    %v586 = vpop.f32.mrb[0].mxu0
    %v587 = vpop.f32.mrb[0].mxu0
    %588 = vdwg.mxu0
    %589 = vst [vmem:[#allocation5] sm:$0xff] %v584
    // Predicated region
    $region18: #{representation_model_forward.1} parent=1 // pred_check
      _
    $region19: #{representation_model_forward.1} parent=1 // pred_check_branch
      %591 = sbr.rel (0) target = $region21
    $region20: #{representation_model_forward.1} parent=1 // pred_region
      %s593 = ssub.s32 128, 128
      %594 = vsyncadd [#allocation4], %s593
      %s596 = sshll.u32 [#allocation5], 4
      %s597 = int_to_ptr.vmem [resolvable:$true] %s596
      %599 = dma.vmem_to_hbm [thread:$0]  %s597, 128, %s3, [#allocation4]
    $region21: #{representation_model_forward.1} parent=1 // pred_fallthru
      _
    // Predicated region
    $region22: #{representation_model_forward.1} parent=1 // pred_check
      _
    $region23: #{representation_model_forward.1} parent=1 // pred_check_branch
      %601 = sbr.rel (0) target = $region25
    $region24: #{representation_model_forward.1} parent=1 // pred_region
      %602 = dma.done [#allocation4], 128
    $region25: #{representation_model_forward.1} parent=1 // pred_fallthru
      _
    %603 = vsyncpa [#allocation3], 1
    %604 = vsyncpa [#allocation4], 1

</llo_original>
